<compile_context>
chip_gen: v7x
topology: tpu7x:2x2x1
jax: 0.10.0
libtpu: 0.0.40
codegen_flags: <defaults>
</compile_context>

<pallas_src>
import jax
import jax.numpy as jnp
from jax.experimental import pallas as pl
from jax.experimental.pallas import tpu as pltpu


def _round_up(n: int, m: int) -> int:
    return ((n + m - 1) // m) * m


def _llama_mlp_kernel(x_ref, wgu_ref, wd_ref, o_ref, acc_ref):
    """One (token-tile, I-tile) step of the fused SwiGLU MLP.

    x_ref  : (tm, H)       token tile (compute dtype)
    wgu_ref: (H, 2*ti)     fused [gate | up] weight slab for this I-tile
    wd_ref : (ti, H)       down_proj weight slab for this I-tile
    o_ref  : (tm, H)       output tile (written on the last I step)
    acc_ref: (tm, H) f32   VMEM accumulator, persists across the I (reduction) axis
    """
    j = pl.program_id(1)

    @pl.when(j == 0)
    def _init():
        acc_ref[...] = jnp.zeros_like(acc_ref)

    x = x_ref[...]
    # Single fused MXU pass over [gate | up] columns of this intermediate slice.
    gu = jnp.dot(x, wgu_ref[...], preferred_element_type=jnp.float32)
    ti = wgu_ref.shape[1] // 2
    gate = gu[:, :ti]
    up = gu[:, ti:]
    # SiLU epilogue in f32 (VPU/EUP slots are idle while the MXU is binding).
    hidden = (gate * jax.nn.sigmoid(gate)) * up
    acc_ref[...] += jnp.dot(hidden.astype(wd_ref.dtype), wd_ref[...],
                            preferred_element_type=jnp.float32)

    @pl.when(j == pl.num_programs(1) - 1)
    def _finalize():
        o_ref[...] = acc_ref[...].astype(o_ref.dtype)


def llama_mlp(x, wg, wu, wd, *, tm=256, ti=512, compute_dtype=None):
    """Fused SwiGLU MLP.

    x      : (..., H)
    wg, wu : (H, I)   gate_proj / up_proj weights, pre-transposed vs torch (out, in)
    wd     : (I, H)   down_proj weight, pre-transposed
    Returns (..., H) in x.dtype.
    """
    orig_shape = x.shape
    out_dtype = x.dtype
    H = orig_shape[-1]
    I = wg.shape[1]
    if compute_dtype is None:
        compute_dtype = x.dtype
    compute_dtype = jnp.dtype(compute_dtype)

    # ---- token axis: flatten, clamp tile for tiny inputs, pad to a tile multiple ----
    x2 = x.reshape(-1, H).astype(compute_dtype)
    M = x2.shape[0]
    tm_eff = min(tm, _round_up(M, 8))          # second-to-last block dim must be %8
    M_pad = _round_up(M, tm_eff)
    if M_pad != M:
        x2 = jnp.pad(x2, ((0, M_pad - M), (0, 0)))

    # ---- intermediate axis: pick a lane-aligned tile and zero-pad I if needed ----
    if I <= ti:
        ti_eff = I                              # single I tile; block == full array
    else:
        ti_eff = max(128, (ti // 128) * 128)    # multiple of 128 -> lane aligned
    I_pad = _round_up(I, ti_eff)
    nI = I_pad // ti_eff

    def pad_cols(w):
        return jnp.pad(w, ((0, 0), (0, I_pad - I))) if I_pad != I else w

    wg_p = pad_cols(wg.astype(compute_dtype))
    wu_p = pad_cols(wu.astype(compute_dtype))
    wd_p = wd.astype(compute_dtype)
    if I_pad != I:
        wd_p = jnp.pad(wd_p, ((0, I_pad - I), (0, 0)))

    # Fuse gate/up so that I-tile j occupies contiguous columns [gate_j | up_j].
    # TODO(synk): in a real model, do this weight re-layout once at load time.
    wgu = jnp.stack(
        [wg_p.reshape(H, nI, ti_eff), wu_p.reshape(H, nI, ti_eff)], axis=2
    ).reshape(H, nI * 2 * ti_eff)

    grid = (M_pad // tm_eff, nI)

    # ---- VMEM budget (double-buffered inputs/outputs + f32 accumulator) ----
    cbytes = compute_dtype.itemsize
    obytes = jnp.dtype(out_dtype).itemsize
    vmem_needed = (
        2 * tm_eff * H * cbytes            # x tiles
        + 2 * H * 2 * ti_eff * cbytes      # wgu slabs
        + 2 * ti_eff * H * cbytes          # wd slabs
        + 2 * tm_eff * H * obytes          # output tiles
        + tm_eff * H * 4                   # f32 accumulator scratch
    )
    vmem_limit = max(int(vmem_needed * 1.3), 32 * 1024 * 1024)

    cost = pl.CostEstimate(
        flops=int(6 * M * H * I),                     # 2*M*H*(2I) + 2*M*I*H
        transcendentals=int(M * I),                   # sigmoid
        bytes_accessed=int(M * H * cbytes + wgu.size * cbytes
                           + wd_p.size * cbytes + M * H * obytes),
    )

    out = pl.pallas_call(
        _llama_mlp_kernel,
        out_shape=jax.ShapeDtypeStruct((M_pad, H), out_dtype),
        grid_spec=pltpu.PrefetchScalarGridSpec(
            num_scalar_prefetch=0,
            grid=grid,
            in_specs=[
                pl.BlockSpec((tm_eff, H), lambda i, j: (i, 0)),        # x tile
                pl.BlockSpec((H, 2 * ti_eff), lambda i, j: (0, j)),    # [gate|up] slab
                pl.BlockSpec((ti_eff, H), lambda i, j: (j, 0)),        # down slab
            ],
            out_specs=pl.BlockSpec((tm_eff, H), lambda i, j: (i, 0)),
            scratch_shapes=[pltpu.VMEM((tm_eff, H), jnp.float32)],
        ),
        compiler_params=pltpu.CompilerParams(
            dimension_semantics=("parallel", "arbitrary"),
            vmem_limit_bytes=vmem_limit,
        ),
        cost_estimate=cost,
    )(x2, wgu, wd_p)

    return out[:M].reshape(orig_shape)


if __name__ == "__main__":
    # Small shapes consistent with the module.
    batch, seq, hidden_size, intermediate_size = 2, 8, 32, 64

    key = jax.random.PRNGKey(0)
    kx, kg, ku, kd = jax.random.split(key, 4)

    x = jax.random.normal(kx, (batch, seq, hidden_size), dtype=jnp.float32)

    # torch Linear stores (out, in); weights here are pre-transposed to (in, out).
    wg = (jax.random.normal(kg, (hidden_size, intermediate_size), dtype=jnp.float32)
          * (1.0 / hidden_size ** 0.5))
    wu = (jax.random.normal(ku, (hidden_size, intermediate_size), dtype=jnp.float32)
          * (1.0 / hidden_size ** 0.5))
    wd = (jax.random.normal(kd, (intermediate_size, hidden_size), dtype=jnp.float32)
          * (1.0 / intermediate_size ** 0.5))

    # Pure-JAX reference (SwiGLU).
    gate = x @ wg
    ref = (gate * jax.nn.sigmoid(gate) * (x @ wu)) @ wd

    # f32 compute path: strict check.
    out = llama_mlp(x, wg, wu, wd)
    out = jax.block_until_ready(out)
    assert out.shape == x.shape
    assert jnp.allclose(out, ref, atol=1e-5, rtol=1e-5), "f32 mismatch vs reference"

    # bf16 compute path (the intended production dtype): loose check.
    out_bf16 = llama_mlp(x, wg, wu, wd, compute_dtype=jnp.bfloat16)
    out_bf16 = jax.block_until_ready(out_bf16)
    assert out_bf16.shape == x.shape
    assert jnp.allclose(out_bf16.astype(jnp.float32), ref, atol=0.1, rtol=0.1), \
        "bf16 mismatch vs reference"

    print("KERNEL_OK")
</pallas_src>

<mosaic_0001>
module attributes {stable_mosaic.version = 11 : i64} {
  func.func @_llama_mlp_kernel(%arg0: i32, %arg1: i32, %arg2: memref<16x32xf32, #tpu.memory_space<vmem>>, %arg3: memref<32x128xf32, #tpu.memory_space<vmem>>, %arg4: memref<64x32xf32, #tpu.memory_space<vmem>>, %arg5: memref<16x32xf32, #tpu.memory_space<vmem>>, %arg6: memref<16x32xf32, #tpu.memory_space<vmem>>) attributes {dimension_semantics = [#tpu.dimension_semantics<parallel>, #tpu.dimension_semantics<arbitrary>], iteration_bounds = array<i64: 1, 1>, scalar_prefetch = 0 : i64, scratch_operands = 1 : i64, tpu.core_type = #tpu.core_type<tc>, window_params = [{transform_indices = @transform_0, window_bounds = array<i64: 16, 32>}, {transform_indices = @transform_1, window_bounds = array<i64: 32, 128>}, {transform_indices = @transform_2, window_bounds = array<i64: 64, 32>}, {transform_indices = @transform_3, window_bounds = array<i64: 16, 32>}]} {
    %c0_i32 = arith.constant 0 : i32
    %0 = arith.cmpi eq, %arg1, %c0_i32 : i32
    %1 = arith.extui %0 : i1 to i32
    %c0_i32_0 = arith.constant 0 : i32
    %2 = arith.cmpi ne, %1, %c0_i32_0 : i32
    scf.if %2 {
      %cst_14 = arith.constant 0.000000e+00 : f32
      %23 = vector.broadcast %cst_14 : f32 to vector<16x32xf32>
      %c0_15 = arith.constant 0 : index
      %c0_16 = arith.constant 0 : index
      %24 = vector.load %arg6[%c0_15, %c0_16] : memref<16x32xf32, #tpu.memory_space<vmem>>, vector<16x32xf32>
      tpu.vector_store %arg6[%c0_15, %c0_16], %23 {strides = array<i32>} : memref<16x32xf32, #tpu.memory_space<vmem>>, vector<16x32xf32>,
    } else {
    }
    %c0 = arith.constant 0 : index
    %c0_1 = arith.constant 0 : index
    %3 = vector.load %arg2[%c0, %c0_1] : memref<16x32xf32, #tpu.memory_space<vmem>>, vector<16x32xf32>
    %c0_2 = arith.constant 0 : index
    %c0_3 = arith.constant 0 : index
    %4 = vector.load %arg3[%c0_2, %c0_3] : memref<32x128xf32, #tpu.memory_space<vmem>>, vector<32x128xf32>
    %cst = arith.constant dense<0.000000e+00> : vector<16x128xf32>
    %5 = tpu.matmul %3, %4, %cst {dimension_numbers = #tpu.dot_dimension_numbers<[1], [0], [0], [1], [0, 0, 1, 1], [], []>} : vector<16x32xf32>, vector<32x128xf32>, vector<16x128xf32> -> vector<16x128xf32>
    %6 = vector.extract_strided_slice %5 {offsets = [0, 0], sizes = [16, 64], strides = [1, 1]} : vector<16x128xf32> to vector<16x64xf32>
    %7 = vector.extract_strided_slice %5 {offsets = [0, 64], sizes = [16, 64], strides = [1, 1]} : vector<16x128xf32> to vector<16x64xf32>
    %8 = arith.negf %6 : vector<16x64xf32>
    %9 = math.exp %8 : vector<16x64xf32>
    %cst_4 = arith.constant 1.000000e+00 : f32
    %10 = vector.broadcast %cst_4 : f32 to vector<16x64xf32>
    %11 = arith.addf %10, %9 : vector<16x64xf32>
    %12 = arith.divf %10, %11 : vector<16x64xf32>
    %13 = arith.mulf %6, %12 : vector<16x64xf32>
    %14 = arith.mulf %13, %7 : vector<16x64xf32>
    %c0_5 = arith.constant 0 : index
    %c0_6 = arith.constant 0 : index
    %15 = vector.load %arg6[%c0_5, %c0_6] : memref<16x32xf32, #tpu.memory_space<vmem>>, vector<16x32xf32>
    %c0_7 = arith.constant 0 : index
    %c0_8 = arith.constant 0 : index
    %16 = vector.load %arg4[%c0_7, %c0_8] : memref<64x32xf32, #tpu.memory_space<vmem>>, vector<64x32xf32>
    %cst_9 = arith.constant dense<0.000000e+00> : vector<16x32xf32>
    %17 = tpu.matmul %14, %16, %cst_9 {dimension_numbers = #tpu.dot_dimension_numbers<[1], [0], [0], [1], [0, 0, 1, 1], [], []>} : vector<16x64xf32>, vector<64x32xf32>, vector<16x32xf32> -> vector<16x32xf32>
    %18 = arith.addf %15, %17 : vector<16x32xf32>
    %c0_10 = arith.constant 0 : index
    %c0_11 = arith.constant 0 : index
    %19 = vector.load %arg6[%c0_10, %c0_11] : memref<16x32xf32, #tpu.memory_space<vmem>>, vector<16x32xf32>
    tpu.vector_store %arg6[%c0_10, %c0_11], %18 {strides = array<i32>} : memref<16x32xf32, #tpu.memory_space<vmem>>, vector<16x32xf32>,
    %c0_i32_12 = arith.constant 0 : i32
    %20 = arith.cmpi eq, %arg1, %c0_i32_12 : i32
    %21 = arith.extui %20 : i1 to i32
    %c0_i32_13 = arith.constant 0 : i32
    %22 = arith.cmpi ne, %21, %c0_i32_13 : i32
    scf.if %22 {
      %c0_14 = arith.constant 0 : index
      %c0_15 = arith.constant 0 : index
      %23 = vector.load %arg6[%c0_14, %c0_15] : memref<16x32xf32, #tpu.memory_space<vmem>>, vector<16x32xf32>
      %c0_16 = arith.constant 0 : index
      %c0_17 = arith.constant 0 : index
      %24 = vector.load %arg5[%c0_16, %c0_17] : memref<16x32xf32, #tpu.memory_space<vmem>>, vector<16x32xf32>
      tpu.vector_store %arg5[%c0_16, %c0_17], %23 {strides = array<i32>} : memref<16x32xf32, #tpu.memory_space<vmem>>, vector<16x32xf32>,
    } else {
    }
    return
  }
  func.func @transform_0(%arg0: i32, %arg1: i32) -> (i32, i32) {
    %c0_i32 = arith.constant 0 : i32
    %c0_i32_0 = arith.constant 0 : i32
    return %arg0, %c0_i32 : i32, i32
  }
  func.func @transform_1(%arg0: i32, %arg1: i32) -> (i32, i32) {
    %c0_i32 = arith.constant 0 : i32
    %c0_i32_0 = arith.constant 0 : i32
    return %c0_i32, %arg1 : i32, i32
  }
  func.func @transform_2(%arg0: i32, %arg1: i32) -> (i32, i32) {
    %c0_i32 = arith.constant 0 : i32
    %c0_i32_0 = arith.constant 0 : i32
    return %arg1, %c0_i32 : i32, i32
  }
  func.func @transform_3(%arg0: i32, %arg1: i32) -> (i32, i32) {
    %c0_i32 = arith.constant 0 : i32
    %c0_i32_0 = arith.constant 0 : i32
    return %arg0, %c0_i32 : i32, i32
  }
}

</mosaic_0001>

<llo_original>
// kernel: tpu_custom_call.1
$region0: #{tpu_custom_call.1}
  #allocation0 [shape = 'u32[]', space=smem, size = 0x4, offset = 0x4, fixed_abs, tag = 'smem constant byte address 0x4 - core index']
  #allocation1 [shape = 'u32[144,128]{1,0:T(1,128)}', space=vmem, size = 0x12000, scoped, tag = 'internal scratch']
  #allocation2 [shape = 'f32[16,32]{1,0:T(8,128)}', space=vmem, size = 0x2000, scoped, tag = 'scratch operand']
  %s0 = inlined_call_operand.vmem [shape: f32[16,32], index: 0, kind: input, shape index: {}]
  %s1 = inlined_call_operand.vmem [shape: f32[32,128], index: 1, kind: input, shape index: {}]
  %s2 = inlined_call_operand.vmem [shape: f32[64,32], index: 2, kind: input, shape index: {}]
  %s3 = inlined_call_operand.hbm [shape: f32[16,32], index: 3, kind: output, shape index: {}]
  %s4 = sld [smem:[#allocation0]]
  $region30: #{tpu_custom_call.1} parent=0
    _
  %s6 = ssub.s32 1, %s4
  %s7 = scalar_select 0, %s6, %s4
  $region1: #{tpu_custom_call.1} parent=0
    #allocation3 [shape = 'u8[8192]{0}', space=vmem, size = 0x2000, scoped, tag = 'output window, operand 0, single buffered']
    #allocation4 [shape = 's32[1]{0}', space=sflag, size = 0x4, scoped, tag = 'scoped memory for tpu_custom_call.1']
    %8 = vsyncpa [#allocation4], 0
    // Predicated region
    $region2: #{tpu_custom_call.1} parent=1 // pred_check
      _
    $region3: #{tpu_custom_call.1} parent=1 // pred_check_branch
      %10 = sbr.rel (0) target = $region5
    $region4: #{tpu_custom_call.1} parent=1 // pred_region
      _
    $region5: #{tpu_custom_call.1} parent=1 // pred_fallthru
      _
    // Predicated region
    $region6: #{tpu_custom_call.1} parent=1 // pred_check
      _
    $region7: #{tpu_custom_call.1} parent=1 // pred_check_branch
      %12 = sbr.rel (0) target = $region9
    $region8: #{tpu_custom_call.1} parent=1 // pred_region
      _
    $region9: #{tpu_custom_call.1} parent=1 // pred_fallthru
      _
    // Predicated region
    $region10: #{tpu_custom_call.1} parent=1 // pred_check
      _
    $region11: #{tpu_custom_call.1} parent=1 // pred_check_branch
      %14 = sbr.rel (0) target = $region13
    $region12: #{tpu_custom_call.1} parent=1 // pred_region
      _
    $region13: #{tpu_custom_call.1} parent=1 // pred_fallthru
      _
    %p15 = scmp.eq.s32.totalorder 0, 0
    // Predicated region
    $region14: #{tpu_custom_call.1} parent=1 // pred_check
      %p16 = pneg %p15
    $region15: #{tpu_custom_call.1} parent=1 // pred_check_branch
      %18 = sbr.rel (%p16) target = $region17
    $region16: #{tpu_custom_call.1} parent=1 // pred_region
      %vm19 = vcmask 261120
      %20 = vst.msk [vmem:[#allocation2] sm:$0xff] %vm19, 0.0
      %21 = vst.msk [vmem:[#allocation2 + $0x8] sm:$0xff] %vm19, 0.0
    $region17: #{tpu_custom_call.1} parent=1 // pred_fallthru
      _
    %v22 = vld [vmem:[%s0] sm:$0xff]
    %v23 = vld [vmem:[%s0 + $0x8] sm:$0xff]
    %v24 = vld [vmem:[%s1] sm:$0xff]
    %v25 = vld [vmem:[%s1 + $0x8] sm:$0xff]
    %v26 = vld [vmem:[%s1 + $0x10] sm:$0xff]
    %v27 = vld [vmem:[%s1 + $0x18] sm:$0xff]
    %vm28 = vcmask 261120
    %v30 = vsel %vm28, %v22, 0
    %v33 = vsel %vm28, %v23, 0
    %35 = vmatprep.subr.mxu0 0.0
    %36 = vmatpush1.msra.mxu0 %v24
    %37 = vmatprep.subr.mxu0 0.0
    %38 = vmatpush1.msra.mxu0 %v25
    %39 = vmatprep.subr.mxu0 0.0
    %40 = vmatpush1.msra.mxu0 %v26
    %41 = vmatprep.subr.mxu0 0.0
    %42 = vmatpush1.msra.mxu0 %v27
    %43 = vmatprep.subr.mxu0 0.0
    %44 = vmatpush1.msra.mxu0 0.0
    %45 = vmatprep.subr.mxu0 0.0
    %46 = vmatpush1.msra.mxu0 0.0
    %47 = vmatprep.subr.mxu0 0.0
    %48 = vmatpush1.msra.mxu0 0.0
    %49 = vmatprep.subr.mxu0 0.0
    %50 = vmatpush1.msra.mxu0 0.0
    %51 = vmatprep.subr.mxu0 0.0
    %52 = vmatpush1.msra.mxu0 0.0
    %53 = vmatprep.subr.mxu0 0.0
    %54 = vmatpush1.msra.mxu0 0.0
    %55 = vmatprep.subr.mxu0 0.0
    %56 = vmatpush1.msra.mxu0 0.0
    %57 = vmatprep.subr.mxu0 0.0
    %58 = vmatpush1.msra.mxu0 0.0
    %59 = vmatprep.subr.mxu0 0.0
    %60 = vmatpush1.msra.mxu0 0.0
    %61 = vmatprep.subr.mxu0 0.0
    %62 = vmatpush1.msra.mxu0 0.0
    %63 = vmatprep.subr.mxu0 0.0
    %64 = vmatpush1.msra.mxu0 0.0
    %65 = vmatprep.subr.mxu0 0.0
    %66 = vmatpush1.msra.mxu0 0.0
    %67 = vmatprep.subr.mxu0 0.0
    %68 = vmatpush1.msra.mxu0 0.0
    %69 = vmatprep.subr.mxu0 0.0
    %70 = vmatpush1.msra.mxu0 0.0
    %71 = vmatprep.subr.mxu0 0.0
    %72 = vmatpush1.msra.mxu0 0.0
    %73 = vmatprep.subr.mxu0 0.0
    %74 = vmatpush1.msra.mxu0 0.0
    %75 = vmatprep.subr.mxu0 0.0
    %76 = vmatpush1.msra.mxu0 0.0
    %77 = vmatprep.subr.mxu0 0.0
    %78 = vmatpush1.msra.mxu0 0.0
    %79 = vmatprep.subr.mxu0 0.0
    %80 = vmatpush1.msra.mxu0 0.0
    %81 = vmatprep.subr.mxu0 0.0
    %82 = vmatpush1.msra.mxu0 0.0
    %83 = vmatprep.subr.mxu0 0.0
    %84 = vmatpush1.msra.mxu0 0.0
    %85 = vmatprep.subr.mxu0 0.0
    %86 = vmatpush1.msra.mxu0 0.0
    %87 = vmatprep.subr.mxu0 0.0
    %88 = vmatpush1.msra.mxu0 0.0
    %89 = vmatprep.subr.mxu0 0.0
    %90 = vmatpush1.msra.mxu0 0.0
    %91 = vmatprep.subr.mxu0 0.0
    %92 = vmatpush1.msra.mxu0 0.0
    %93 = vmatprep.subr.mxu0 0.0
    %94 = vmatpush1.msra.mxu0 0.0
    %95 = vmatprep.subr.mxu0 0.0
    %96 = vmatpush1.msra.mxu0 0.0
    %97 = vmatprep.subr.mxu0 0.0
    %98 = vmatpush1.msra.mxu0 0.0
    %99 = vmatprep.mubr.f32.mxu0 0.0
    %100 = vmatmul.mubr.f32.gmra.mrb[0].mxu0 %v30
    %v101 = vpop.f32.mrb[0].mxu0
    %v102 = vadd.f32 0.0, %v101
    %v103 = vpop.f32.mrb[0].mxu0
    %104 = vmatprep.mubr.f32.mxu0 0.0
    %105 = vmatmul.mubr.f32.gmra.mrb[0].mxu0 %v33
    %v106 = vpop.f32.mrb[0].mxu0
    %v107 = vadd.f32 0.0, %v106
    %v108 = vpop.f32.mrb[0].mxu0
    %109 = vdwg.mxu0
    %v110 = vxor.u32 %v102, 2147483648
    %v111 = vxor.u32 %v107, 2147483648
    %v112 = vmul.f32 %v110, 1.442695
    %v113 = vpow.pop %v112
    %v114 = vmul.f32 %v111, 1.442695
    %v115 = vpow.pop %v114
    %v116 = vadd.f32 %v113, 1.0
    %v117 = vadd.f32 %v115, 1.0
    %v118 = vrcp.pop %v116
    %v119 = vmul.f32 1.0, %v118
    %v120 = vrcp.pop %v117
    %v121 = vmul.f32 1.0, %v120
    %v122 = vmul.f32 %v102, %v119
    %v123 = vmul.f32 %v107, %v121
    %126 = vrot.lane.b32.xlu0 %v102, 64
    %v127 = vpop.permute.xlu0 %126
    %128 = vrot.lane.b32.xlu0 %v107, 64
    %v129 = vpop.permute.xlu0 %128
    %v132 = vmul.f32 %v122, %v127
    %v133 = vmul.f32 %v123, %v129
    %v134 = vld [vmem:[#allocation2] sm:$0xff]
    %v135 = vld [vmem:[#allocation2 + $0x8] sm:$0xff]
    %v136 = vld [vmem:[%s2] sm:$0xff]
    %v137 = vld [vmem:[%s2 + $0x8] sm:$0xff]
    %v138 = vld [vmem:[%s2 + $0x10] sm:$0xff]
    %v139 = vld [vmem:[%s2 + $0x18] sm:$0xff]
    %v140 = vld [vmem:[%s2 + $0x20] sm:$0xff]
    %v141 = vld [vmem:[%s2 + $0x28] sm:$0xff]
    %v142 = vld [vmem:[%s2 + $0x30] sm:$0xff]
    %v143 = vld [vmem:[%s2 + $0x38] sm:$0xff]
    %vm144 = vcmask 523264
    %v146 = vsel %vm144, %v132, 0
    %v149 = vsel %vm144, %v133, 0
    %151 = vmatprep.subr.mxu0 0.0
    %152 = vmatpush1.msra.mxu0 %v136
    %153 = vmatprep.subr.mxu0 0.0
    %154 = vmatpush1.msra.mxu0 %v137
    %155 = vmatprep.subr.mxu0 0.0
    %156 = vmatpush1.msra.mxu0 %v138
    %157 = vmatprep.subr.mxu0 0.0
    %158 = vmatpush1.msra.mxu0 %v139
    %159 = vmatprep.subr.mxu0 0.0
    %160 = vmatpush1.msra.mxu0 %v140
    %161 = vmatprep.subr.mxu0 0.0
    %162 = vmatpush1.msra.mxu0 %v141
    %163 = vmatprep.subr.mxu0 0.0
    %164 = vmatpush1.msra.mxu0 %v142
    %165 = vmatprep.subr.mxu0 0.0
    %166 = vmatpush1.msra.mxu0 %v143
    %167 = vmatprep.subr.mxu0 0.0
    %168 = vmatpush1.msra.mxu0 0.0
    %169 = vmatprep.subr.mxu0 0.0
    %170 = vmatpush1.msra.mxu0 0.0
    %171 = vmatprep.subr.mxu0 0.0
    %172 = vmatpush1.msra.mxu0 0.0
    %173 = vmatprep.subr.mxu0 0.0
    %174 = vmatpush1.msra.mxu0 0.0
    %175 = vmatprep.subr.mxu0 0.0
    %176 = vmatpush1.msra.mxu0 0.0
    %177 = vmatprep.subr.mxu0 0.0
    %178 = vmatpush1.msra.mxu0 0.0
    %179 = vmatprep.subr.mxu0 0.0
    %180 = vmatpush1.msra.mxu0 0.0
    %181 = vmatprep.subr.mxu0 0.0
    %182 = vmatpush1.msra.mxu0 0.0
    %183 = vmatprep.subr.mxu0 0.0
    %184 = vmatpush1.msra.mxu0 0.0
    %185 = vmatprep.subr.mxu0 0.0
    %186 = vmatpush1.msra.mxu0 0.0
    %187 = vmatprep.subr.mxu0 0.0
    %188 = vmatpush1.msra.mxu0 0.0
    %189 = vmatprep.subr.mxu0 0.0
    %190 = vmatpush1.msra.mxu0 0.0
    %191 = vmatprep.subr.mxu0 0.0
    %192 = vmatpush1.msra.mxu0 0.0
    %193 = vmatprep.subr.mxu0 0.0
    %194 = vmatpush1.msra.mxu0 0.0
    %195 = vmatprep.subr.mxu0 0.0
    %196 = vmatpush1.msra.mxu0 0.0
    %197 = vmatprep.subr.mxu0 0.0
    %198 = vmatpush1.msra.mxu0 0.0
    %199 = vmatprep.subr.mxu0 0.0
    %200 = vmatpush1.msra.mxu0 0.0
    %201 = vmatprep.subr.mxu0 0.0
    %202 = vmatpush1.msra.mxu0 0.0
    %203 = vmatprep.subr.mxu0 0.0
    %204 = vmatpush1.msra.mxu0 0.0
    %205 = vmatprep.subr.mxu0 0.0
    %206 = vmatpush1.msra.mxu0 0.0
    %207 = vmatprep.subr.mxu0 0.0
    %208 = vmatpush1.msra.mxu0 0.0
    %209 = vmatprep.subr.mxu0 0.0
    %210 = vmatpush1.msra.mxu0 0.0
    %211 = vmatprep.subr.mxu0 0.0
    %212 = vmatpush1.msra.mxu0 0.0
    %213 = vmatprep.subr.mxu0 0.0
    %214 = vmatpush1.msra.mxu0 0.0
    %215 = vmatprep.mubr.f32.mxu0 0.0
    %216 = vmatmul.mubr.f32.gmra.mrb[0].mxu0 %v146
    %v217 = vpop.f32.mrb[0].mxu0
    %v218 = vadd.f32 0.0, %v217
    %v219 = vpop.f32.mrb[0].mxu0
    %220 = vmatprep.mubr.f32.mxu0 0.0
    %221 = vmatmul.mubr.f32.gmra.mrb[0].mxu0 %v149
    %v222 = vpop.f32.mrb[0].mxu0
    %v223 = vadd.f32 0.0, %v222
    %v224 = vpop.f32.mrb[0].mxu0
    %225 = vdwg.mxu0
    %v226 = vadd.f32 %v134, %v218
    %v227 = vadd.f32 %v135, %v223
    %228 = vst.msk [vmem:[#allocation2] sm:$0xff] %vm28, %v226
    %229 = vst.msk [vmem:[#allocation2 + $0x8] sm:$0xff] %vm28, %v227
    // Predicated region
    $region18: #{tpu_custom_call.1} parent=1 // pred_check
      %p230 = pneg %p15
    $region19: #{tpu_custom_call.1} parent=1 // pred_check_branch
      %232 = sbr.rel (%p230) target = $region21
    $region20: #{tpu_custom_call.1} parent=1 // pred_region
      %v233 = vld [vmem:[#allocation2] sm:$0xff]
      %v234 = vld [vmem:[#allocation2 + $0x8] sm:$0xff]
      %235 = vst.msk [vmem:[#allocation3] sm:$0xff] %vm28, %v233
      %236 = vst.msk [vmem:[#allocation3 + $0x8] sm:$0xff] %vm28, %v234
    $region21: #{tpu_custom_call.1} parent=1 // pred_fallthru
      _
    // Predicated region
    $region22: #{tpu_custom_call.1} parent=1 // pred_check
      _
    $region23: #{tpu_custom_call.1} parent=1 // pred_check_branch
      %238 = sbr.rel (0) target = $region25
    $region24: #{tpu_custom_call.1} parent=1 // pred_region
      %s240 = ssub.s32 256, 256
      %241 = vsyncadd [#allocation4], %s240
      %s242 = sshll.u32 [#allocation3], 4
      %s243 = int_to_ptr.vmem [resolvable:$true] %s242
      %248 = dma.vmem_to_hbm [thread:$0]  %s243, 256, %s3, [#allocation4], 128, 128, 8
    $region25: #{tpu_custom_call.1} parent=1 // pred_fallthru
      _
    // Predicated region
    $region26: #{tpu_custom_call.1} parent=1 // pred_check
      _
    $region27: #{tpu_custom_call.1} parent=1 // pred_check_branch
      %250 = sbr.rel (0) target = $region29
    $region28: #{tpu_custom_call.1} parent=1 // pred_region
      %251 = dma.done [#allocation4], 256
    $region29: #{tpu_custom_call.1} parent=1 // pred_fallthru
      _
    %252 = vsyncpa [#allocation4], 1

</llo_original>
